<compile_context>
chip_gen: v6e
topology: v6e:2x2x1
jax: 0.10.0
libtpu: 0.0.40
codegen_flags: <defaults>
</compile_context>

<pallas_src>
import functools

import jax
import jax.numpy as jnp
from jax import lax
from jax.experimental import pallas as pl
from jax.experimental.pallas import tpu as pltpu

EPS = 1e-5  # nn.LayerNorm default eps


def _round_up(n, m):
    return ((n + m - 1) // m) * m


def _choose_tm(m, h, *, x_bytes=4, out_bytes=4, w_elt_bytes=2,
               target_bytes=2 << 20, tm_max=2048, vmem_budget=48 << 20):
    """Row-tile size.

    Payload-aware (each grid step should move ~target_bytes of x so the
    ~0.35us/step overhead is amortized), capped by a VMEM budget that is safe
    on v5e/v6e/v7x, and kept small enough that large-M problems get >= 4 grid
    steps (2 per v7x TensorCore under dimension_semantics=('parallel',)).
    """
    tm = max(target_bytes // max(h * x_bytes, 1), 8)

    # VMEM accounting: double-buffered x tile + double-buffered out tile +
    # ~3 f32 tile-sized compute temporaries + double-buffered (H,H) W and bias.
    w_foot = 2 * (h * h * w_elt_bytes + h * 4)
    per_row = h * (2 * x_bytes + 2 * out_bytes + 3 * 4)
    avail = vmem_budget - w_foot - (4 << 20)
    if avail <= per_row * 8:
        # TODO(synk): column-tile W (second grid axis over N) for very large H
        # where a full (H, H) weight does not fit the VMEM budget.
        tm = 8
    else:
        tm = min(tm, avail // per_row)

    tm = min(tm, tm_max)
    if m >= 1024:                      # keep >= 4 grid steps when M is large
        tm = min(tm, pl.cdiv(m, 4))
    tm = min(tm, _round_up(m, 8))      # never exceed the (8-rounded) row count
    return max((tm // 8) * 8, 8)


def _hash_bits(shape, tm, h, seed, pid):
    """Portable counter-based PRNG: 31 uniform bits per element, keyed on the
    GLOBAL element index (tiling-invariant) and the seed.  Pure int32 jnp ops
    (mul/xor/shift/and) so it lowers on Mosaic and on the CPU interpreter."""
    row = lax.broadcasted_iota(jnp.int32, shape, 0)
    col = lax.broadcasted_iota(jnp.int32, shape, 1)
    v = (pid * jnp.int32(tm) + row) * jnp.int32(h) + col
    v = v + seed * jnp.int32(0x61C88647)
    # hash32 (two xorshift-multiply rounds); arithmetic shift + mask == logical.
    v = (v ^ ((v >> 16) & 0xFFFF)) * jnp.int32(0x045D9F3B)
    v = (v ^ ((v >> 16) & 0xFFFF)) * jnp.int32(0x045D9F3B)
    v = v ^ ((v >> 16) & 0xFFFF)
    return v & jnp.int32(0x7FFFFFFF)


def _sublayer_connection_kernel(seed_ref, x_ref, w_ref, b_ref, o_ref, *,
                                dropout_p, training, matmul_dtype):
    # x tile: (TM, H).  LayerNorm statistics in f32 on the VPU.
    x = x_ref[...]
    xf = x if x.dtype == jnp.float32 else x.astype(jnp.float32)

    mean = jnp.mean(xf, axis=-1, keepdims=True)
    m2 = jnp.mean(xf * xf, axis=-1, keepdims=True)
    var = jnp.maximum(m2 - mean * mean, 0.0)
    xn = (xf - mean) * lax.rsqrt(var + EPS)
    # LayerNorm affine (gamma, beta) is folded into W'/b' on the host.

    # Sublayer Linear(H -> H) on the MXU; bf16 operands by default, f32 acc.
    y = jnp.dot(xn.astype(matmul_dtype), w_ref[...],
                preferred_element_type=jnp.float32) + b_ref[...]

    # Dropout: identity in eval mode (matches PyTorch module.eval()).
    if training and 0.0 < dropout_p < 1.0:
        bits = _hash_bits(y.shape, y.shape[0], y.shape[1],
                          seed_ref[0], pl.program_id(0))
        threshold = min(int(round(float(dropout_p) * float(1 << 31))),
                        (1 << 31) - 1)
        keep = bits >= jnp.int32(threshold)
        y = jnp.where(keep, y * (1.0 / (1.0 - dropout_p)), 0.0)
    elif training and dropout_p >= 1.0:
        y = jnp.zeros_like(y)

    # Residual add in f32; one lane-dense store per tile.
    o_ref[...] = (xf + y).astype(o_ref.dtype)


def sublayer_connection(x, gamma, beta, w, b, *, dropout_p=0.5, training=False,
                        seed=0, matmul_dtype=jnp.bfloat16, out_dtype=None,
                        tm_max=2048, vmem_budget=48 << 20):
    """x: [B, S, H].  Returns x + dropout(Linear(LayerNorm(x)))."""
    B, S, H = x.shape
    M = B * S
    out_dtype = x.dtype if out_dtype is None else out_dtype

    x_elt = jnp.dtype(x.dtype).itemsize
    o_elt = jnp.dtype(out_dtype).itemsize
    w_elt = jnp.dtype(matmul_dtype).itemsize

    tm = _choose_tm(M, H, x_bytes=x_elt, out_bytes=o_elt, w_elt_bytes=w_elt,
                    tm_max=tm_max, vmem_budget=vmem_budget)
    grid_m = pl.cdiv(M, tm)  # ragged last block: padded reads, masked writes

    # Explicit VMEM budget for this tiling (+ headroom), generation-safe caps.
    w_foot = 2 * (H * H * w_elt + H * 4)
    tile_foot = tm * H * (2 * x_elt + 2 * o_elt + 3 * 4)
    vmem_limit = int(min(max(w_foot + tile_foot + (8 << 20), 32 << 20),
                         60 << 20))

    xf = x.reshape(M, H)  # free reshape; no pad, no copy

    # Fold the LayerNorm affine into the sublayer Linear (host-side, one-off):
    #   (xn*gamma + beta) @ W + b == xn @ (gamma[:,None]*W) + (beta @ W + b)
    w_f32 = w.astype(jnp.float32)
    w_fold = (gamma.astype(jnp.float32)[:, None] * w_f32).astype(matmul_dtype)
    b_fold = (beta.astype(jnp.float32) @ w_f32
              + b.astype(jnp.float32)).reshape(1, H)

    kernel = functools.partial(_sublayer_connection_kernel,
                               dropout_p=float(dropout_p),
                               training=bool(training),
                               matmul_dtype=matmul_dtype)

    cost = pl.CostEstimate(
        flops=2 * M * H * H + 10 * M * H,
        transcendentals=M,
        bytes_accessed=M * H * (x_elt + o_elt) + H * H * w_elt)

    out = pl.pallas_call(
        kernel,
        out_shape=jax.ShapeDtypeStruct((M, H), out_dtype),
        grid=(grid_m,),
        in_specs=[
            pl.BlockSpec(memory_space=pltpu.MemorySpace.SMEM),    # seed scalar
            pl.BlockSpec((tm, H), lambda i: (i, 0)),              # x tile
            pl.BlockSpec((H, H), lambda i: (0, 0)),               # folded W
            pl.BlockSpec((1, H), lambda i: (0, 0)),               # folded b
        ],
        out_specs=pl.BlockSpec((tm, H), lambda i: (i, 0)),
        compiler_params=pltpu.CompilerParams(
            dimension_semantics=("parallel",),
            vmem_limit_bytes=vmem_limit),
        cost_estimate=cost,
    )(jnp.array([seed], jnp.int32), xf, w_fold, b_fold)

    return out.reshape(B, S, H).astype(out_dtype)


def _reference(x, gamma, beta, w, b):
    # Eval-mode PyTorch semantics: dropout == identity.
    x = x.astype(jnp.float32)
    mean = x.mean(-1, keepdims=True)
    var = ((x - mean) ** 2).mean(-1, keepdims=True)
    xn = (x - mean) / jnp.sqrt(var + EPS) * gamma + beta
    return x + (xn @ w + b)


if __name__ == "__main__":
    B, S, H = 2, 8, 128
    key = jax.random.PRNGKey(0)
    kx, kw, kg, kb = jax.random.split(key, 4)

    x = jax.random.normal(kx, (B, S, H), dtype=jnp.float32)
    gamma = 1.0 + 0.1 * jax.random.normal(kg, (H,), dtype=jnp.float32)
    beta = 0.1 * jax.random.normal(kb, (H,), dtype=jnp.float32)
    w = jax.random.normal(kw, (H, H), dtype=jnp.float32) * (1.0 / (H ** 0.5))
    b = 0.05 * jnp.ones((H,), jnp.float32)

    ref = _reference(x, gamma, beta, w, b)

    # 1) f32 matmul path (strict accuracy).
    out_f32 = jax.block_until_ready(sublayer_connection(
        x, gamma, beta, w, b, dropout_p=0.5, training=False,
        matmul_dtype=jnp.float32))
    assert out_f32.shape == (B, S, H)
    err = float(jnp.max(jnp.abs(out_f32 - ref)))
    assert err < 2e-4, err

    # 2) default bf16-operand MXU path (f32 accumulation).
    out_bf16 = jax.block_until_ready(sublayer_connection(
        x, gamma, beta, w, b, dropout_p=0.5, training=False))
    assert float(jnp.max(jnp.abs(out_bf16 - ref))) < 7e-2

    # 3) Ragged M (21 rows, not a multiple of 8): no host-side pad/slice,
    #    Pallas masks the ragged last block.
    B2, S2 = 3, 7
    x2 = jax.random.normal(jax.random.PRNGKey(1), (B2, S2, H), jnp.float32)
    ref2 = _reference(x2, gamma, beta, w, b)
    out2 = jax.block_until_ready(sublayer_connection(
        x2, gamma, beta, w, b, training=False, matmul_dtype=jnp.float32))
    assert out2.shape == (B2, S2, H)
    assert float(jnp.max(jnp.abs(out2 - ref2))) < 2e-4

    # 4) Training-mode dropout (portable in-kernel counter-hash PRNG):
    #    finite output, roughly the expected fraction dropped (dropped => out==x).
    out_tr = jax.block_until_ready(sublayer_connection(
        x, gamma, beta, w, b, dropout_p=0.5, training=True, seed=123,
        matmul_dtype=jnp.float32))
    assert out_tr.shape == (B, S, H)
    assert bool(jnp.all(jnp.isfinite(out_tr)))
    dropped_frac = float(jnp.mean(jnp.abs(out_tr - x) < 1e-12))
    assert 0.2 < dropped_frac < 0.8, dropped_frac

    print("KERNEL_OK")
</pallas_src>

<mosaic_0001>
module attributes {stable_mosaic.version = 11 : i64} {
  func.func @_sublayer_connection_kernel(%arg0: i32, %arg1: memref<1xi32, #tpu.memory_space<smem>>, %arg2: memref<16x128xf32, #tpu.memory_space<vmem>>, %arg3: memref<128x128xf32, #tpu.memory_space<vmem>>, %arg4: memref<1x128xf32, #tpu.memory_space<vmem>>, %arg5: memref<16x128xf32, #tpu.memory_space<vmem>>) attributes {dimension_semantics = [#tpu.dimension_semantics<parallel>], iteration_bounds = array<i64: 1>, scalar_prefetch = 0 : i64, scratch_operands = 0 : i64, tpu.core_type = #tpu.core_type<tc>, window_params = [{transform_indices = @transform_0, window_bounds = array<i64: 1>}, {transform_indices = @transform_1, window_bounds = array<i64: 16, 128>}, {pipeline_mode = #tpu.pipeline_mode<synchronous>, transform_indices = @transform_2, window_bounds = array<i64: 128, 128>}, {pipeline_mode = #tpu.pipeline_mode<synchronous>, transform_indices = @transform_3, window_bounds = array<i64: 1, 128>}, {transform_indices = @transform_4, window_bounds = array<i64: 16, 128>}]} {
    %c0 = arith.constant 0 : index
    %c0_0 = arith.constant 0 : index
    %0 = vector.load %arg2[%c0, %c0_0] : memref<16x128xf32, #tpu.memory_space<vmem>>, vector<16x128xf32>
    %cst = arith.constant dense<0.000000e+00> : vector<16xf32>
    %1 = vector.multi_reduction <add>, %0, %cst [1] : vector<16x128xf32> to vector<16xf32>
    %2 = vector.shape_cast %1 : vector<16xf32> to vector<16x1xf32>
    %cst_1 = arith.constant 1.280000e+02 : f32
    %3 = vector.broadcast %cst_1 : f32 to vector<16x1xf32>
    %4 = arith.divf %2, %3 : vector<16x1xf32>
    %5 = arith.mulf %0, %0 : vector<16x128xf32>
    %cst_2 = arith.constant dense<0.000000e+00> : vector<16xf32>
    %6 = vector.multi_reduction <add>, %5, %cst_2 [1] : vector<16x128xf32> to vector<16xf32>
    %7 = vector.shape_cast %6 : vector<16xf32> to vector<16x1xf32>
    %cst_3 = arith.constant 1.280000e+02 : f32
    %8 = vector.broadcast %cst_3 : f32 to vector<16x1xf32>
    %9 = arith.divf %7, %8 : vector<16x1xf32>
    %10 = arith.mulf %4, %4 : vector<16x1xf32>
    %11 = arith.subf %9, %10 : vector<16x1xf32>
    %cst_4 = arith.constant 0.000000e+00 : f32
    %12 = vector.broadcast %cst_4 : f32 to vector<16x1xf32>
    %13 = arith.maximumf %11, %12 : vector<16x1xf32>
    %14 = vector.broadcast %4 : vector<16x1xf32> to vector<16x128xf32>
    %15 = arith.subf %0, %14 : vector<16x128xf32>
    %cst_5 = arith.constant 9.99999974E-6 : f32
    %16 = vector.broadcast %cst_5 : f32 to vector<16x1xf32>
    %17 = arith.addf %13, %16 : vector<16x1xf32>
    %18 = math.rsqrt %17 : vector<16x1xf32>
    %19 = vector.broadcast %18 : vector<16x1xf32> to vector<16x128xf32>
    %20 = arith.mulf %15, %19 : vector<16x128xf32>
    %c0_6 = arith.constant 0 : index
    %c0_7 = arith.constant 0 : index
    %21 = vector.load %arg3[%c0_6, %c0_7] : memref<128x128xf32, #tpu.memory_space<vmem>>, vector<128x128xf32>
    %cst_8 = arith.constant dense<0.000000e+00> : vector<16x128xf32>
    %22 = tpu.matmul %20, %21, %cst_8 {dimension_numbers = #tpu.dot_dimension_numbers<[1], [0], [0], [1], [0, 0, 1, 1], [], []>} : vector<16x128xf32>, vector<128x128xf32>, vector<16x128xf32> -> vector<16x128xf32>
    %c0_9 = arith.constant 0 : index
    %c0_10 = arith.constant 0 : index
    %23 = vector.load %arg4[%c0_9, %c0_10] : memref<1x128xf32, #tpu.memory_space<vmem>>, vector<1x128xf32>
    %24 = vector.broadcast %23 : vector<1x128xf32> to vector<16x128xf32>
    %25 = arith.addf %22, %24 : vector<16x128xf32>
    %26 = arith.addf %0, %25 : vector<16x128xf32>
    %c0_11 = arith.constant 0 : index
    %c0_12 = arith.constant 0 : index
    %27 = vector.load %arg5[%c0_11, %c0_12] : memref<16x128xf32, #tpu.memory_space<vmem>>, vector<16x128xf32>
    tpu.vector_store %arg5[%c0_11, %c0_12], %26 {strides = array<i32>} : memref<16x128xf32, #tpu.memory_space<vmem>>, vector<16x128xf32>,
    return
  }
  func.func @transform_0(%arg0: i32) -> i32 {
    %c0_i32 = arith.constant 0 : i32
    %c0_i32_0 = arith.constant 0 : i32
    return %c0_i32 : i32
  }
  func.func @transform_1(%arg0: i32) -> (i32, i32) {
    %c0_i32 = arith.constant 0 : i32
    %c0_i32_0 = arith.constant 0 : i32
    return %arg0, %c0_i32 : i32, i32
  }
  func.func @transform_2(%arg0: i32) -> (i32, i32) {
    %c0_i32 = arith.constant 0 : i32
    %c0_i32_0 = arith.constant 0 : i32
    %c0_i32_1 = arith.constant 0 : i32
    return %c0_i32, %c0_i32_0 : i32, i32
  }
  func.func @transform_3(%arg0: i32) -> (i32, i32) {
    %c0_i32 = arith.constant 0 : i32
    %c0_i32_0 = arith.constant 0 : i32
    %c0_i32_1 = arith.constant 0 : i32
    return %c0_i32, %c0_i32_0 : i32, i32
  }
  func.func @transform_4(%arg0: i32) -> (i32, i32) {
    %c0_i32 = arith.constant 0 : i32
    %c0_i32_0 = arith.constant 0 : i32
    return %arg0, %c0_i32 : i32, i32
  }
}

</mosaic_0001>

<llo_original>
// kernel: tpu_custom_call.1
$region0: #{tpu_custom_call.1}
  #allocation0 [shape = 'u32[]', space=smem, size = 0x4, offset = 0x4, fixed_abs, tag = 'smem constant byte address 0x4 - core index']
  #allocation1 [shape = 'u32[144,128]{1,0:T(1,128)}', space=vmem, size = 0x12000, scoped, tag = 'internal scratch']
  #allocation2 [shape = 's32[1]{0:T(128)S(6)}', space=smem, size = 0x200, scoped, tag = 'scoped memory for tpu_custom_call.1']
  %s0 = inlined_call_operand.<no memory space> [shape: s32[1], index: 0, kind: input, shape index: {}]
  %s1 = inlined_call_operand.hbm [shape: f32[16,128], index: 1, kind: input, shape index: {}]
  %s2 = inlined_call_operand.hbm [shape: f32[128,128], index: 2, kind: input, shape index: {}]
  %s3 = inlined_call_operand.vmem [shape: f32[1,128], index: 3, kind: input, shape index: {}]
  %s4 = inlined_call_operand.hbm [shape: f32[16,128], index: 4, kind: output, shape index: {}]
  %s5 = sld [smem:[#allocation0]]
  $region34: #{tpu_custom_call.1} parent=0
    _
  %s7 = ssub.s32 1, %s5
  %s8 = scalar_select 0, %s7, %s5
  %9 = sst [smem:[#allocation2]] %s0
  $region1: #{tpu_custom_call.1} parent=0
    #allocation3 [shape = 'u8[8192]{0}', space=vmem, size = 0x2000, scoped, tag = 'input window, operand 1, single buffered']
    #allocation4 [shape = 's32[1]{0}', space=sflag, size = 0x4, scoped, tag = 'scoped memory for tpu_custom_call.1']
    #allocation5 [shape = 's32[1]{0}', space=sflag, size = 0x4, scoped, tag = 'scoped memory for tpu_custom_call.1']
    #allocation6 [shape = 'u8[65536]{0}', space=vmem, size = 0x10000, scoped, tag = 'input window, operand 2, single buffered']
    #allocation7 [shape = 's32[1]{0}', space=sflag, size = 0x4, scoped, tag = 'scoped memory for tpu_custom_call.1']
    #allocation8 [shape = 'u8[8192]{0}', space=vmem, size = 0x2000, scoped, tag = 'output window, operand 0, single buffered']
    %10 = vsyncpa [#allocation4], 0
    %11 = vsyncpa [#allocation7], 0
    %12 = vsyncpa [#allocation5], 0
    // Predicated region
    $region2: #{tpu_custom_call.1} parent=1 // pred_check
      _
    $region3: #{tpu_custom_call.1} parent=1 // pred_check_branch
      %14 = sbr.rel (0) target = $region5
    $region4: #{tpu_custom_call.1} parent=1 // pred_region
      _
    $region5: #{tpu_custom_call.1} parent=1 // pred_fallthru
      _
    // Predicated region
    $region6: #{tpu_custom_call.1} parent=1 // pred_check
      _
    $region7: #{tpu_custom_call.1} parent=1 // pred_check_branch
      %16 = sbr.rel (0) target = $region9
    $region8: #{tpu_custom_call.1} parent=1 // pred_region
      %s18 = ssub.s32 256, 256
      %19 = vsyncadd [#allocation4], %s18
      %s20 = sshll.u32 [#allocation3], 4
      %s21 = int_to_ptr.vmem [resolvable:$true] %s20
      %26 = dma.hbm_to_vmem [thread:$0]  %s1, 256, %s21, [#allocation4], 128, 128, 8
    $region9: #{tpu_custom_call.1} parent=1 // pred_fallthru
      _
    // Predicated region
    $region10: #{tpu_custom_call.1} parent=1 // pred_check
      _
    $region11: #{tpu_custom_call.1} parent=1 // pred_check_branch
      %28 = sbr.rel (0) target = $region13
    $region12: #{tpu_custom_call.1} parent=1 // pred_region
      %s30 = ssub.s32 2048, 2048
      %31 = vsyncadd [#allocation7], %s30
      %s32 = sshll.u32 [#allocation6], 4
      %s33 = int_to_ptr.vmem [resolvable:$true] %s32
      %38 = dma.hbm_to_vmem [thread:$0]  %s2, 2048, %s33, [#allocation7], 128, 128, 8
    $region13: #{tpu_custom_call.1} parent=1 // pred_fallthru
      _
    // Predicated region
    $region14: #{tpu_custom_call.1} parent=1 // pred_check
      _
    $region15: #{tpu_custom_call.1} parent=1 // pred_check_branch
      %40 = sbr.rel (0) target = $region17
    $region16: #{tpu_custom_call.1} parent=1 // pred_region
      _
    $region17: #{tpu_custom_call.1} parent=1 // pred_fallthru
      _
    // Predicated region
    $region18: #{tpu_custom_call.1} parent=1 // pred_check
      _
    $region19: #{tpu_custom_call.1} parent=1 // pred_check_branch
      %42 = sbr.rel (0) target = $region21
    $region20: #{tpu_custom_call.1} parent=1 // pred_region
      %43 = dma.done [#allocation4], 256
    $region21: #{tpu_custom_call.1} parent=1 // pred_fallthru
      _
    // Predicated region
    $region22: #{tpu_custom_call.1} parent=1 // pred_check
      _
    $region23: #{tpu_custom_call.1} parent=1 // pred_check_branch
      %45 = sbr.rel (0) target = $region25
    $region24: #{tpu_custom_call.1} parent=1 // pred_region
      %46 = dma.done [#allocation7], 2048
    $region25: #{tpu_custom_call.1} parent=1 // pred_fallthru
      _
    %v47 = vld [vmem:[#allocation3] sm:$0xff]
    %v48 = vld [vmem:[#allocation3 + $0x8] sm:$0xff]
    %49 = vadd.xlane.f32.xlu0 %v47
    %v50 = vpop.xlane.xlu0 %49
    %51 = vadd.xlane.f32.xlu0 %v48
    %v52 = vpop.xlane.xlu0 %51
    %v53 = vrcp.pop 128.0
    %v54 = vmul.f32 %v50, %v53
    %v55 = vmul.f32 %v52, %v53
    %v56 = vmul.f32 %v47, %v47
    %v57 = vmul.f32 %v48, %v48
    %58 = vadd.xlane.f32.xlu0 %v56
    %v59 = vpop.xlane.xlu0 %58
    %60 = vadd.xlane.f32.xlu0 %v57
    %v61 = vpop.xlane.xlu0 %60
    %v62 = vmul.f32 %v59, %v53
    %v63 = vmul.f32 %v61, %v53
    %v64 = vmul.f32 %v54, %v54
    %v65 = vmul.f32 %v55, %v55
    %v66 = vsub.f32 %v62, %v64
    %v67 = vsub.f32 %v63, %v65
    %v68 = vmax.f32 %v66, 0.0
    %v69 = vmax.f32 %v67, 0.0
    %v70 = vsub.f32 %v47, %v54
    %v71 = vsub.f32 %v48, %v55
    %v72 = vadd.f32 %v68, 1e-05
    %v73 = vadd.f32 %v69, 1e-05
    %v74 = vrsqrt.pop %v72
    %v75 = vrsqrt.pop %v73
    %v76 = vmul.f32 %v70, %v74
    %v77 = vmul.f32 %v71, %v75
    %v78 = vld [vmem:[#allocation6] sm:$0xff]
    %v79 = vld [vmem:[#allocation6 + $0x8] sm:$0xff]
    %v80 = vld [vmem:[#allocation6 + $0x10] sm:$0xff]
    %v81 = vld [vmem:[#allocation6 + $0x18] sm:$0xff]
    %v82 = vld [vmem:[#allocation6 + $0x20] sm:$0xff]
    %v83 = vld [vmem:[#allocation6 + $0x28] sm:$0xff]
    %v84 = vld [vmem:[#allocation6 + $0x30] sm:$0xff]
    %v85 = vld [vmem:[#allocation6 + $0x38] sm:$0xff]
    %v86 = vld [vmem:[#allocation6 + $0x40] sm:$0xff]
    %v87 = vld [vmem:[#allocation6 + $0x48] sm:$0xff]
    %v88 = vld [vmem:[#allocation6 + $0x50] sm:$0xff]
    %v89 = vld [vmem:[#allocation6 + $0x58] sm:$0xff]
    %v90 = vld [vmem:[#allocation6 + $0x60] sm:$0xff]
    %v91 = vld [vmem:[#allocation6 + $0x68] sm:$0xff]
    %v92 = vld [vmem:[#allocation6 + $0x70] sm:$0xff]
    %v93 = vld [vmem:[#allocation6 + $0x78] sm:$0xff]
    %v94 = vld [vmem:[%s3] sm:$0x1]
    %v96 = vlaneseq
    %v97 = vshrl.u32 %v96, 7
    %v98 = vsub.s32 0, %v97
    %v99 = vrot.slane %v94, %v98
    %101 = vmatprep.subr.mxu0 0.0
    %102 = vmatpush1.msra.mxu0 %v93
    %103 = vmatprep.subr.mxu0 0.0
    %104 = vmatpush1.msra.mxu0 %v92
    %105 = vmatprep.subr.mxu0 0.0
    %106 = vmatpush1.msra.mxu0 %v91
    %107 = vmatprep.subr.mxu0 0.0
    %108 = vmatpush1.msra.mxu0 %v90
    %109 = vmatprep.subr.mxu0 0.0
    %110 = vmatpush1.msra.mxu0 %v89
    %111 = vmatprep.subr.mxu0 0.0
    %112 = vmatpush1.msra.mxu0 %v88
    %113 = vmatprep.subr.mxu0 0.0
    %114 = vmatpush1.msra.mxu0 %v87
    %115 = vmatprep.subr.mxu0 0.0
    %116 = vmatpush1.msra.mxu0 %v86
    %117 = vmatprep.subr.mxu0 0.0
    %118 = vmatpush1.msra.mxu0 %v85
    %119 = vmatprep.subr.mxu0 0.0
    %120 = vmatpush1.msra.mxu0 %v84
    %121 = vmatprep.subr.mxu0 0.0
    %122 = vmatpush1.msra.mxu0 %v83
    %123 = vmatprep.subr.mxu0 0.0
    %124 = vmatpush1.msra.mxu0 %v82
    %125 = vmatprep.subr.mxu0 0.0
    %126 = vmatpush1.msra.mxu0 %v81
    %127 = vmatprep.subr.mxu0 0.0
    %128 = vmatpush1.msra.mxu0 %v80
    %129 = vmatprep.subr.mxu0 0.0
    %130 = vmatpush1.msra.mxu0 %v79
    %131 = vmatprep.subr.mxu0 0.0
    %132 = vmatpush1.msra.mxu0 %v78
    %133 = vmatprep.subr.mxu0 0.0
    %134 = vmatpush2.msra.mxu0 0.0
    %135 = vmatprep.subr.mxu0 0.0
    %136 = vmatpush2.msra.mxu0 0.0
    %137 = vmatprep.subr.mxu0 0.0
    %138 = vmatpush2.msra.mxu0 0.0
    %139 = vmatprep.subr.mxu0 0.0
    %140 = vmatpush2.msra.mxu0 0.0
    %141 = vmatprep.subr.mxu0 0.0
    %142 = vmatpush2.msra.mxu0 0.0
    %143 = vmatprep.subr.mxu0 0.0
    %144 = vmatpush2.msra.mxu0 0.0
    %145 = vmatprep.subr.mxu0 0.0
    %146 = vmatpush2.msra.mxu0 0.0
    %147 = vmatprep.subr.mxu0 0.0
    %148 = vmatpush2.msra.mxu0 0.0
    %149 = vmatprep.subr.mxu0 0.0
    %150 = vmatpush2.msra.mxu0 0.0
    %151 = vmatprep.subr.mxu0 0.0
    %152 = vmatpush2.msra.mxu0 0.0
    %153 = vmatprep.subr.mxu0 0.0
    %154 = vmatpush2.msra.mxu0 0.0
    %155 = vmatprep.subr.mxu0 0.0
    %156 = vmatpush2.msra.mxu0 0.0
    %157 = vmatprep.subr.mxu0 0.0
    %158 = vmatpush2.msra.mxu0 0.0
    %159 = vmatprep.subr.mxu0 0.0
    %160 = vmatpush2.msra.mxu0 0.0
    %161 = vmatprep.subr.mxu0 0.0
    %162 = vmatpush2.msra.mxu0 0.0
    %163 = vmatprep.subr.mxu0 0.0
    %164 = vmatpush2.msra.mxu0 0.0
    %165 = vmatprep.mubr.f32.mxu0 0.0
    %166 = vmatmul.mubr.f32.gmra.mxu0 %v76
    %v167 = vpop.f32.mrf.mxu0
    %v168 = vadd.f32 %v99, %v167
    %v169 = vpop.f32.mrf.mxu0
    %170 = vmatprep.mubr.f32.mxu0 0.0
    %171 = vmatmul.mubr.f32.gmra.mxu0 %v77
    %v172 = vpop.f32.mrf.mxu0
    %v173 = vadd.f32 %v99, %v172
    %v174 = vpop.f32.mrf.mxu0
    %175 = vdwg.mxu0
    %v176 = vadd.f32 %v47, %v168
    %v177 = vadd.f32 %v48, %v173
    %178 = vst [vmem:[#allocation8] sm:$0xff] %v176
    %179 = vst [vmem:[#allocation8 + $0x8] sm:$0xff] %v177
    // Predicated region
    $region26: #{tpu_custom_call.1} parent=1 // pred_check
      _
    $region27: #{tpu_custom_call.1} parent=1 // pred_check_branch
      %181 = sbr.rel (0) target = $region29
    $region28: #{tpu_custom_call.1} parent=1 // pred_region
      %s183 = ssub.s32 256, 256
      %184 = vsyncadd [#allocation5], %s183
      %s185 = sshll.u32 [#allocation8], 4
      %s186 = int_to_ptr.vmem [resolvable:$true] %s185
      %191 = dma.vmem_to_hbm [thread:$0]  %s186, 256, %s4, [#allocation5], 128, 128, 8
    $region29: #{tpu_custom_call.1} parent=1 // pred_fallthru
      _
    // Predicated region
    $region30: #{tpu_custom_call.1} parent=1 // pred_check
      _
    $region31: #{tpu_custom_call.1} parent=1 // pred_check_branch
      %193 = sbr.rel (0) target = $region33
    $region32: #{tpu_custom_call.1} parent=1 // pred_region
      %194 = dma.done [#allocation5], 256
    $region33: #{tpu_custom_call.1} parent=1 // pred_fallthru
      _
    %195 = vsyncpa [#allocation4], 1
    %196 = vsyncpa [#allocation7], 1
    %197 = vsyncpa [#allocation5], 1

</llo_original>
